<compile_context>
chip_gen: v5e
topology: v5e:2x2
jax: 0.10.0
libtpu: 0.0.40
codegen_flags: <defaults>
</compile_context>

<pallas_src>
import functools

import jax
import jax.numpy as jnp
from jax import lax
from jax.experimental import pallas as pl
from jax.experimental.pallas import tpu as pltpu

LANE = 128
DEFAULT_BLOCK_ROWS = 1024   # (1024,128) f32 = 512 KiB per input per buffer


def _round_up(x, m):
    return (x + m - 1) // m * m


def _tversky_sums_kernel(p_ref, t_ref, o_ref, *, n_valid, block_rows,
                         steps_per_core, need_mask):
    """One grid step: fold a (block_rows, 128) tile of logits/targets into
    per-lane partial sums for [p*t, p, t, bce], accumulated in the resident
    (32, 128) f32 output block (rows 0:8 / 8:16 / 16:24 / 24:32)."""
    c = pl.program_id(0)      # "parallel" (core-split) axis
    i = pl.program_id(1)      # "arbitrary" (reduction) axis

    @pl.when(i == 0)
    def _init():
        o_ref[...] = jnp.zeros_like(o_ref)

    x = p_ref[...].astype(jnp.float32)
    t = t_ref[...].astype(jnp.float32)

    p = jax.nn.sigmoid(x)
    # Numerically stable BCE-with-logits (same formula PyTorch uses), reusing
    # the already-computed sigmoid:
    #   log1p(exp(-|x|)) = -log(sigmoid(|x|)) = -log(where(x>=0, p, 1-p))
    bce = jnp.maximum(x, 0.0) - x * t - jnp.log(jnp.where(x >= 0.0, p, 1.0 - p))
    pt = p * t

    if need_mask:
        # Mask padded lanes / out-of-bounds rows of (possibly partial /
        # duplicated) tiles.  jnp.where (select) is safe even if the OOB
        # region contains NaN/inf garbage.
        b = c * steps_per_core + i              # logical block id
        row = lax.broadcasted_iota(jnp.int32, x.shape, 0)
        col = lax.broadcasted_iota(jnp.int32, x.shape, 1)
        flat = (b * block_rows + row) * LANE + col
        valid = flat < n_valid
        pt = jnp.where(valid, pt, 0.0)
        p = jnp.where(valid, p, 0.0)
        t = jnp.where(valid, t, 0.0)
        bce = jnp.where(valid, bce, 0.0)

    def fold(v):
        # (block_rows, 128) -> (8, 128) per-lane partials; pure VPU adds,
        # no cross-lane (XLU) reduction in the hot loop.
        return v.reshape(block_rows // 8, 8, LANE).sum(axis=0)

    o_ref[0:8, :] += fold(pt)
    o_ref[8:16, :] += fold(p)
    o_ref[16:24, :] += fold(t)
    o_ref[24:32, :] += fold(bce)


@functools.partial(jax.jit, static_argnames=("alpha", "beta", "gamma", "smooth"))
def tversky_focal_loss(preds, targets, alpha=0.5, beta=0.5, gamma=2.0,
                       smooth=1e-08):
    assert preds.shape == targets.shape
    n = preds.size

    p_flat = preds.reshape(-1)
    t_flat = targets.reshape(-1)

    # Minimal pad to a 128-lane multiple only when required (pure reshape for
    # the common contiguous case); native dtype streamed, cast in-kernel.
    n_lane = _round_up(n, LANE)
    if n_lane != n:
        p_flat = jnp.pad(p_flat, (0, n_lane - n))
        t_flat = jnp.pad(t_flat, (0, n_lane - n))
    rows = n_lane // LANE
    p2 = p_flat.reshape(rows, LANE)
    t2 = t_flat.reshape(rows, LANE)

    block_rows = min(DEFAULT_BLOCK_ROWS, _round_up(rows, 16))
    total_blocks = pl.cdiv(rows, block_rows)
    ncores = 2 if total_blocks >= 2 else 1       # 2-way split (helps v7x)
    steps = pl.cdiv(total_blocks, ncores)
    cover = ncores * steps

    # In-kernel masking needed if: ragged lane tail, partial last block, or
    # over-covering duplicate blocks from the 2-way split.
    need_mask = (n != rows * LANE) or (rows % block_rows != 0) \
        or (cover != total_blocks)

    if cover != total_blocks:
        # Clamp duplicate trailing block ids to a valid block; their
        # contribution is zeroed by the in-kernel mask.
        def in_map(c, i):
            return (jnp.minimum(c * steps + i, total_blocks - 1), 0)
    else:
        def in_map(c, i):
            return (c * steps + i, 0)

    kernel = functools.partial(
        _tversky_sums_kernel, n_valid=n, block_rows=block_rows,
        steps_per_core=steps, need_mask=need_mask)

    acc = pl.pallas_call(
        kernel,
        out_shape=jax.ShapeDtypeStruct((ncores, 4 * 8, LANE), jnp.float32),
        grid_spec=pltpu.PrefetchScalarGridSpec(
            num_scalar_prefetch=0,
            grid=(ncores, steps),
            in_specs=[
                pl.BlockSpec((block_rows, LANE), in_map),
                pl.BlockSpec((block_rows, LANE), in_map),
            ],
            out_specs=pl.BlockSpec((None, 4 * 8, LANE),
                                   lambda c, i: (c, 0, 0)),
        ),
        compiler_params=pltpu.CompilerParams(
            dimension_semantics=("parallel", "arbitrary"),
            vmem_limit_bytes=32 * 1024 * 1024),
    )(p2, t2)

    # Tiny epilogue in plain JAX.
    sums = acc.reshape(ncores, 4, 8, LANE).sum(axis=(0, 2, 3))
    intersection = sums[0]
    fps = sums[1] - intersection          # sum(p)       - sum(p*t)
    fns = sums[2] - intersection          # sum(t)       - sum(p*t)
    bce_mean = sums[3] / jnp.float32(n)

    tversky = (intersection + smooth) / (
        intersection + alpha * fps + beta * fns + smooth)
    tversky_loss = 1.0 - tversky
    focal_loss = (1.0 - tversky) ** gamma * bce_mean
    return tversky_loss + focal_loss


def _reference_loss(preds, targets, alpha=0.5, beta=0.5, gamma=2.0,
                    smooth=1e-08):
    x = preds.astype(jnp.float32)
    t = targets.astype(jnp.float32)
    bce = jnp.maximum(x, 0.0) - x * t + jnp.log1p(jnp.exp(-jnp.abs(x)))
    p = jax.nn.sigmoid(x)
    inter = jnp.sum(p * t)
    fps = jnp.sum(p * (1.0 - t))
    fns = jnp.sum((1.0 - p) * t)
    tversky = (inter + smooth) / (inter + alpha * fps + beta * fns + smooth)
    return (1.0 - tversky) + (1.0 - tversky) ** gamma * jnp.mean(bce)


if __name__ == "__main__":
    # TverskyFocalLoss has no learnable parameters; only hyperparameters.
    key = jax.random.PRNGKey(0)
    k1, k2, k3, k4, k5, k6 = jax.random.split(key, 6)

    # 1) NCHW logits/targets, lane-aligned numel -> fast no-mask path.
    B, C, H, W = 2, 4, 16, 16
    preds = jax.random.normal(k1, (B, C, H, W), dtype=jnp.float32)
    targets = (jax.random.uniform(k2, (B, C, H, W)) > 0.5).astype(jnp.float32)
    loss = jax.block_until_ready(tversky_focal_loss(preds, targets))
    ref = _reference_loss(preds, targets)
    assert jnp.allclose(loss, ref, rtol=1e-4, atol=1e-6), (loss, ref)

    # 2) Ragged numel (not a multiple of 128) -> in-kernel tail masking +
    #    partial block handling.
    preds2 = jax.random.normal(k3, (3, 5, 7, 11), dtype=jnp.float32)
    targets2 = (jax.random.uniform(k4, (3, 5, 7, 11)) > 0.5).astype(jnp.float32)
    loss2 = jax.block_until_ready(tversky_focal_loss(preds2, targets2))
    ref2 = _reference_loss(preds2, targets2)
    assert jnp.allclose(loss2, ref2, rtol=1e-4, atol=1e-6), (loss2, ref2)

    # 3) Larger input -> multiple blocks, 2-way parallel grid axis, clamped
    #    index map with fully-masked duplicate tail block.
    preds3 = jax.random.normal(k5, (300_000,), dtype=jnp.float32)
    targets3 = (jax.random.uniform(k6, (300_000,)) > 0.5).astype(jnp.float32)
    loss3 = jax.block_until_ready(tversky_focal_loss(preds3, targets3))
    ref3 = _reference_loss(preds3, targets3)
    assert jnp.allclose(loss3, ref3, rtol=1e-4, atol=1e-6), (loss3, ref3)

    print("KERNEL_OK")
</pallas_src>

<mosaic_0001>
module attributes {stable_mosaic.version = 11 : i64} {
  func.func @_tversky_sums_kernel(%arg0: i32, %arg1: i32, %arg2: memref<16x128xf32, #tpu.memory_space<vmem>>, %arg3: memref<16x128xf32, #tpu.memory_space<vmem>>, %arg4: memref<1x32x128xf32, #tpu.memory_space<vmem>>) attributes {dimension_semantics = [#tpu.dimension_semantics<parallel>, #tpu.dimension_semantics<arbitrary>], iteration_bounds = array<i64: 1, 1>, scalar_prefetch = 0 : i64, scratch_operands = 0 : i64, tpu.core_type = #tpu.core_type<tc>, window_params = [{transform_indices = @transform_0, window_bounds = array<i64: 16, 128>}, {transform_indices = @transform_1, window_bounds = array<i64: 16, 128>}, {transform_indices = @transform_2, window_bounds = array<i64: 1, 32, 128>}]} {
    %c0_i32 = arith.constant 0 : i32
    %0 = arith.cmpi eq, %arg1, %c0_i32 : i32
    %1 = arith.extui %0 : i1 to i32
    %c0_i32_0 = arith.constant 0 : i32
    %2 = arith.cmpi ne, %1, %c0_i32_0 : i32
    scf.if %2 {
      %cst_32 = arith.constant 0.000000e+00 : f32
      %54 = vector.broadcast %cst_32 : f32 to vector<32x128xf32>
      %c0_33 = arith.constant 0 : index
      %c0_34 = arith.constant 0 : index
      %c0_35 = arith.constant 0 : index
      %55 = vector.load %arg4[%c0_33, %c0_34, %c0_35] : memref<1x32x128xf32, #tpu.memory_space<vmem>>, vector<1x32x128xf32>
      %56 = vector.shape_cast %55 : vector<1x32x128xf32> to vector<32x128xf32>
      %57 = vector.shape_cast %54 : vector<32x128xf32> to vector<1x32x128xf32>
      tpu.vector_store %arg4[%c0_33, %c0_34, %c0_35], %57 {strides = array<i32>} : memref<1x32x128xf32, #tpu.memory_space<vmem>>, vector<1x32x128xf32>,
    } else {
    }
    %c0 = arith.constant 0 : index
    %c0_1 = arith.constant 0 : index
    %3 = vector.load %arg2[%c0, %c0_1] : memref<16x128xf32, #tpu.memory_space<vmem>>, vector<16x128xf32>
    %c0_2 = arith.constant 0 : index
    %c0_3 = arith.constant 0 : index
    %4 = vector.load %arg3[%c0_2, %c0_3] : memref<16x128xf32, #tpu.memory_space<vmem>>, vector<16x128xf32>
    %5 = arith.negf %3 : vector<16x128xf32>
    %6 = math.exp %5 : vector<16x128xf32>
    %cst = arith.constant 1.000000e+00 : f32
    %7 = vector.broadcast %cst : f32 to vector<16x128xf32>
    %8 = arith.addf %7, %6 : vector<16x128xf32>
    %9 = arith.divf %7, %8 : vector<16x128xf32>
    %cst_4 = arith.constant 0.000000e+00 : f32
    %10 = vector.broadcast %cst_4 : f32 to vector<16x128xf32>
    %11 = arith.maximumf %3, %10 : vector<16x128xf32>
    %12 = arith.mulf %3, %4 : vector<16x128xf32>
    %13 = arith.subf %11, %12 : vector<16x128xf32>
    %cst_5 = arith.constant 0.000000e+00 : f32
    %14 = vector.broadcast %cst_5 : f32 to vector<16x128xf32>
    %15 = arith.cmpf oge, %3, %14 : vector<16x128xf32>
    %cst_6 = arith.constant 1.000000e+00 : f32
    %16 = vector.broadcast %cst_6 : f32 to vector<16x128xf32>
    %17 = arith.subf %16, %9 : vector<16x128xf32>
    %18 = arith.select %15, %9, %17 : vector<16x128xi1>, vector<16x128xf32>
    %19 = math.log %18 : vector<16x128xf32>
    %20 = arith.subf %13, %19 : vector<16x128xf32>
    %21 = arith.mulf %9, %4 : vector<16x128xf32>
    %c0_7 = arith.constant 0 : index
    %c0_8 = arith.constant 0 : index
    %c0_9 = arith.constant 0 : index
    %22 = vector.load %arg4[%c0_7, %c0_8, %c0_9] : memref<1x32x128xf32, #tpu.memory_space<vmem>>, vector<1x8x128xf32>
    %23 = vector.shape_cast %22 : vector<1x8x128xf32> to vector<8x128xf32>
    %24 = vector.shape_cast %21 : vector<16x128xf32> to vector<2x8x128xf32>
    %cst_10 = arith.constant dense<0.000000e+00> : vector<8x128xf32>
    %25 = vector.multi_reduction <add>, %24, %cst_10 [0] : vector<2x8x128xf32> to vector<8x128xf32>
    %26 = arith.addf %23, %25 : vector<8x128xf32>
    %c0_11 = arith.constant 0 : index
    %c0_12 = arith.constant 0 : index
    %c0_13 = arith.constant 0 : index
    %27 = vector.load %arg4[%c0_11, %c0_12, %c0_13] : memref<1x32x128xf32, #tpu.memory_space<vmem>>, vector<1x8x128xf32>
    %28 = vector.shape_cast %27 : vector<1x8x128xf32> to vector<8x128xf32>
    %29 = vector.shape_cast %26 : vector<8x128xf32> to vector<1x8x128xf32>
    tpu.vector_store %arg4[%c0_11, %c0_12, %c0_13], %29 {strides = array<i32>} : memref<1x32x128xf32, #tpu.memory_space<vmem>>, vector<1x8x128xf32>,
    %c0_14 = arith.constant 0 : index
    %c8 = arith.constant 8 : index
    %c0_15 = arith.constant 0 : index
    %30 = vector.load %arg4[%c0_14, %c8, %c0_15] : memref<1x32x128xf32, #tpu.memory_space<vmem>>, vector<1x8x128xf32>
    %31 = vector.shape_cast %30 : vector<1x8x128xf32> to vector<8x128xf32>
    %32 = vector.shape_cast %9 : vector<16x128xf32> to vector<2x8x128xf32>
    %cst_16 = arith.constant dense<0.000000e+00> : vector<8x128xf32>
    %33 = vector.multi_reduction <add>, %32, %cst_16 [0] : vector<2x8x128xf32> to vector<8x128xf32>
    %34 = arith.addf %31, %33 : vector<8x128xf32>
    %c0_17 = arith.constant 0 : index
    %c8_18 = arith.constant 8 : index
    %c0_19 = arith.constant 0 : index
    %35 = vector.load %arg4[%c0_17, %c8_18, %c0_19] : memref<1x32x128xf32, #tpu.memory_space<vmem>>, vector<1x8x128xf32>
    %36 = vector.shape_cast %35 : vector<1x8x128xf32> to vector<8x128xf32>
    %37 = vector.shape_cast %34 : vector<8x128xf32> to vector<1x8x128xf32>
    tpu.vector_store %arg4[%c0_17, %c8_18, %c0_19], %37 {strides = array<i32>} : memref<1x32x128xf32, #tpu.memory_space<vmem>>, vector<1x8x128xf32>,
    %c0_20 = arith.constant 0 : index
    %c16 = arith.constant 16 : index
    %c0_21 = arith.constant 0 : index
    %38 = vector.load %arg4[%c0_20, %c16, %c0_21] : memref<1x32x128xf32, #tpu.memory_space<vmem>>, vector<1x8x128xf32>
    %39 = vector.shape_cast %38 : vector<1x8x128xf32> to vector<8x128xf32>
    %40 = vector.shape_cast %4 : vector<16x128xf32> to vector<2x8x128xf32>
    %cst_22 = arith.constant dense<0.000000e+00> : vector<8x128xf32>
    %41 = vector.multi_reduction <add>, %40, %cst_22 [0] : vector<2x8x128xf32> to vector<8x128xf32>
    %42 = arith.addf %39, %41 : vector<8x128xf32>
    %c0_23 = arith.constant 0 : index
    %c16_24 = arith.constant 16 : index
    %c0_25 = arith.constant 0 : index
    %43 = vector.load %arg4[%c0_23, %c16_24, %c0_25] : memref<1x32x128xf32, #tpu.memory_space<vmem>>, vector<1x8x128xf32>
    %44 = vector.shape_cast %43 : vector<1x8x128xf32> to vector<8x128xf32>
    %45 = vector.shape_cast %42 : vector<8x128xf32> to vector<1x8x128xf32>
    tpu.vector_store %arg4[%c0_23, %c16_24, %c0_25], %45 {strides = array<i32>} : memref<1x32x128xf32, #tpu.memory_space<vmem>>, vector<1x8x128xf32>,
    %c0_26 = arith.constant 0 : index
    %c24 = arith.constant 24 : index
    %c0_27 = arith.constant 0 : index
    %46 = vector.load %arg4[%c0_26, %c24, %c0_27] : memref<1x32x128xf32, #tpu.memory_space<vmem>>, vector<1x8x128xf32>
    %47 = vector.shape_cast %46 : vector<1x8x128xf32> to vector<8x128xf32>
    %48 = vector.shape_cast %20 : vector<16x128xf32> to vector<2x8x128xf32>
    %cst_28 = arith.constant dense<0.000000e+00> : vector<8x128xf32>
    %49 = vector.multi_reduction <add>, %48, %cst_28 [0] : vector<2x8x128xf32> to vector<8x128xf32>
    %50 = arith.addf %47, %49 : vector<8x128xf32>
    %c0_29 = arith.constant 0 : index
    %c24_30 = arith.constant 24 : index
    %c0_31 = arith.constant 0 : index
    %51 = vector.load %arg4[%c0_29, %c24_30, %c0_31] : memref<1x32x128xf32, #tpu.memory_space<vmem>>, vector<1x8x128xf32>
    %52 = vector.shape_cast %51 : vector<1x8x128xf32> to vector<8x128xf32>
    %53 = vector.shape_cast %50 : vector<8x128xf32> to vector<1x8x128xf32>
    tpu.vector_store %arg4[%c0_29, %c24_30, %c0_31], %53 {strides = array<i32>} : memref<1x32x128xf32, #tpu.memory_space<vmem>>, vector<1x8x128xf32>,
    return
  }
  func.func @transform_0(%arg0: i32, %arg1: i32) -> (i32, i32) {
    %c1_i32 = arith.constant 1 : i32
    %0 = arith.muli %arg0, %c1_i32 : i32
    %1 = arith.addi %0, %arg1 : i32
    %c0_i32 = arith.constant 0 : i32
    %c0_i32_0 = arith.constant 0 : i32
    return %1, %c0_i32 : i32, i32
  }
  func.func @transform_1(%arg0: i32, %arg1: i32) -> (i32, i32) {
    %c1_i32 = arith.constant 1 : i32
    %0 = arith.muli %arg0, %c1_i32 : i32
    %1 = arith.addi %0, %arg1 : i32
    %c0_i32 = arith.constant 0 : i32
    %c0_i32_0 = arith.constant 0 : i32
    return %1, %c0_i32 : i32, i32
  }
  func.func @transform_2(%arg0: i32, %arg1: i32) -> (i32, i32, i32) {
    %c0_i32 = arith.constant 0 : i32
    %c0_i32_0 = arith.constant 0 : i32
    %c0_i32_1 = arith.constant 0 : i32
    return %arg0, %c0_i32, %c0_i32_0 : i32, i32, i32
  }
}

</mosaic_0001>

<llo_original>
// kernel: tversky_focal_loss.1
$region0: #{tversky_focal_loss.1}
  #allocation0 [shape = 'u32[]', space=smem, size = 0x4, offset = 0x4, fixed_abs, tag = 'smem constant byte address 0x4 - core index']
  #allocation1 [shape = 'u32[72,128]{1,0:T(1,128)}', space=vmem, size = 0x9000, scoped, tag = 'internal scratch']
  %s0 = inlined_call_operand.vmem [shape: f32[16,128], index: 0, kind: input, shape index: {}]
  %s1 = inlined_call_operand.vmem [shape: f32[16,128], index: 1, kind: input, shape index: {}]
  %s2 = inlined_call_operand.vmem [shape: f32[1,32,128], index: 2, kind: output, shape index: {}]
  %s3 = sld [smem:[#allocation0]]
  $region22: #{tversky_focal_loss.1} parent=0
    _
  %s5 = ssub.s32 1, %s3
  %s6 = scalar_select 0, %s5, %s3
  // Predicated region
  $region2: #{tversky_focal_loss.1} parent=0 // pred_check
    _
  $region3: #{tversky_focal_loss.1} parent=0 // pred_check_branch
    %8 = sbr.rel (0) target = $region5
  $region4: #{tversky_focal_loss.1} parent=0 // pred_region
    %s9 = sadd.s32 0, 0
    %s10 = smul.u32 2, %s9
    %p11 = scmp.lt.s32.totalorder %s10, 1
    %s12 = scalar_select %p11, %s10, 1
    %s13 = smul.addr %s12, 8
    %s14 = scalar_lea.vmem %s0, %s13
    %s15 = sadd.s32 0, 0
    %s16 = smul.u32 2, %s15
  $region5: #{tversky_focal_loss.1} parent=0 // pred_fallthru
    _
  // Predicated region
  $region6: #{tversky_focal_loss.1} parent=0 // pred_check
    _
  $region7: #{tversky_focal_loss.1} parent=0 // pred_check_branch
    %18 = sbr.rel (0) target = $region9
  $region8: #{tversky_focal_loss.1} parent=0 // pred_region
    %s19 = sadd.s32 0, 0
    %s20 = smul.u32 2, %s19
    %p21 = scmp.lt.s32.totalorder %s20, 1
    %s22 = scalar_select %p21, %s20, 1
    %s23 = smul.addr %s22, 8
    %s24 = scalar_lea.vmem %s1, %s23
    %s25 = sadd.s32 0, 0
    %s26 = smul.u32 2, %s25
  $region9: #{tversky_focal_loss.1} parent=0 // pred_fallthru
    _
  %s27 = sadd.s32 0, 0
  %s28 = smul.u32 2, %s27
  %p29 = scmp.lt.s32.totalorder %s28, 1
  %s30 = scalar_select %p29, %s28, 1
  %s31 = smul.addr %s30, 8
  %s32 = scalar_lea.vmem %s0, %s31
  %s33 = sadd.s32 0, 0
  %s34 = smul.u32 2, %s33
  %p35 = scmp.lt.s32.totalorder %s34, 1
  %s36 = scalar_select %p35, %s34, 1
  %s37 = smul.addr %s36, 8
  %s38 = scalar_lea.vmem %s1, %s37
  %s39 = sadd.s32 0, 0
  %s40 = smul.u32 2, %s39
  %p41 = scmp.lt.s32.totalorder %s40, 1
  %s42 = scalar_select %p41, %s40, 1
  %s43 = smul.addr %s42, 8
  %s44 = scalar_lea.vmem %s0, %s43
  %s45 = sadd.s32 0, 0
  %s46 = smul.u32 2, %s45
  %s47 = sadd.s32 0, 0
  %s48 = smul.u32 2, %s47
  %p49 = scmp.lt.s32.totalorder %s48, 1
  %s50 = scalar_select %p49, %s48, 1
  %s51 = smul.addr %s50, 8
  %s52 = scalar_lea.vmem %s1, %s51
  %s53 = sadd.s32 0, 0
  %s54 = smul.u32 2, %s53
  %p55 = scmp.eq.s32.totalorder 0, 0
  // Predicated region
  $region10: #{tversky_focal_loss.1} parent=0 // pred_check
    %p56 = pneg %p55
  $region11: #{tversky_focal_loss.1} parent=0 // pred_check_branch
    %58 = sbr.rel (%p56) target = $region13
  $region12: #{tversky_focal_loss.1} parent=0 // pred_region
    %59 = vst [vmem:[%s2] sm:$0xff] 0.0
    %60 = vst [vmem:[%s2 + $0x8] sm:$0xff] 0.0
    %61 = vst [vmem:[%s2 + $0x10] sm:$0xff] 0.0
    %62 = vst [vmem:[%s2 + $0x18] sm:$0xff] 0.0
  $region13: #{tversky_focal_loss.1} parent=0 // pred_fallthru
    _
  %v63 = vld [vmem:[%s44] sm:$0xff]
  %v64 = vld [vmem:[%s44 + $0x8] sm:$0xff]
  %v65 = vld [vmem:[%s52] sm:$0xff]
  %v66 = vld [vmem:[%s52 + $0x8] sm:$0xff]
  %v67 = vxor.u32 %v63, 2147483648
  %v68 = vxor.u32 %v64, 2147483648
  %v69 = vmul.f32 %v67, 1.442695
  %v70 = vpow.pop %v69
  %v71 = vmul.f32 %v68, 1.442695
  %v72 = vpow.pop %v71
  %v73 = vadd.f32 %v70, 1.0
  %v74 = vadd.f32 %v72, 1.0
  %v75 = vrcp.pop %v73
  %v76 = vmul.f32 %v73, %v75
  %v77 = vsub.f32 1.0, %v76
  %v78 = vmul.f32 %v75, %v77
  %v79 = vadd.f32 %v75, %v78
  %vm80 = vweird.f32 %v73
  %vm81 = vweird.f32 %v75
  %vm82 = vmor %vm80, %vm81
  %v83 = vsel %vm82, %v75, %v79
  %v84 = vand.u32 2147483647, %v73
  %vm85 = vcmp.eq.f32.partialorder %v84, 8.507059e+37
  %v86 = vand.u32 %v73, 2147483648
  %v87 = vor.u32 1.1754944e-38, %v86
  %v88 = vsel %vm85, %v87, %v83
  %v89 = vmul.f32 1.0, %v88
  %v90 = vrcp.pop %v74
  %v91 = vmul.f32 %v74, %v90
  %v92 = vsub.f32 1.0, %v91
  %v93 = vmul.f32 %v90, %v92
  %v94 = vadd.f32 %v90, %v93
  %vm95 = vweird.f32 %v74
  %vm96 = vweird.f32 %v90
  %vm97 = vmor %vm95, %vm96
  %v98 = vsel %vm97, %v90, %v94
  %v99 = vand.u32 2147483647, %v74
  %vm100 = vcmp.eq.f32.partialorder %v99, 8.507059e+37
  %v101 = vand.u32 %v74, 2147483648
  %v102 = vor.u32 1.1754944e-38, %v101
  %v103 = vsel %vm100, %v102, %v98
  %v104 = vmul.f32 1.0, %v103
  %v105 = vmax.f32 %v63, 0.0
  %v106 = vmax.f32 %v64, 0.0
  %v107 = vmul.f32 %v63, %v65
  %v108 = vmul.f32 %v64, %v66
  %v109 = vsub.f32 %v105, %v107
  %v110 = vsub.f32 %v106, %v108
  %vm111 = vcmp.ge.f32.partialorder %v63, 0.0
  %vm112 = vcmp.ge.f32.partialorder %v64, 0.0
  %v113 = vsub.f32 1.0, %v89
  %v114 = vsub.f32 1.0, %v104
  %v115 = vsel %vm111, %v89, %v113
  %v116 = vsel %vm112, %v104, %v114
  %v117 = vlog2.pop %v115
  %v118 = vmul.f32 %v117, 0.6931472
  %v119 = vlog2.pop %v116
  %v120 = vmul.f32 %v119, 0.6931472
  %v121 = vsub.f32 %v109, %v118
  %v122 = vsub.f32 %v110, %v120
  %v123 = vmul.f32 %v89, %v65
  %v124 = vmul.f32 %v104, %v66
  %v125 = vld [vmem:[%s2] sm:$0xff]
  %v126 = vadd.f32 %v123, %v124
  %v127 = vadd.f32 %v125, %v126
  %128 = vst [vmem:[%s2] sm:$0xff] %v127
  %v129 = vld [vmem:[%s2 + $0x8] sm:$0xff]
  %v130 = vadd.f32 %v89, %v104
  %v131 = vadd.f32 %v129, %v130
  %132 = vst [vmem:[%s2 + $0x8] sm:$0xff] %v131
  %v133 = vld [vmem:[%s2 + $0x10] sm:$0xff]
  %v134 = vadd.f32 %v65, %v66
  %v135 = vadd.f32 %v133, %v134
  %136 = vst [vmem:[%s2 + $0x10] sm:$0xff] %v135
  %v137 = vld [vmem:[%s2 + $0x18] sm:$0xff]
  %v138 = vadd.f32 %v121, %v122
  %v139 = vadd.f32 %v137, %v138
  %140 = vst [vmem:[%s2 + $0x18] sm:$0xff] %v139
  // Predicated region
  $region14: #{tversky_focal_loss.1} parent=0 // pred_check
    _
  $region15: #{tversky_focal_loss.1} parent=0 // pred_check_branch
    %142 = sbr.rel (0) target = $region17
  $region16: #{tversky_focal_loss.1} parent=0 // pred_region
    _
  $region17: #{tversky_focal_loss.1} parent=0 // pred_fallthru
    _
  // Predicated region
  $region18: #{tversky_focal_loss.1} parent=0 // pred_check
    _
  $region19: #{tversky_focal_loss.1} parent=0 // pred_check_branch
    %144 = sbr.rel (0) target = $region21
  $region20: #{tversky_focal_loss.1} parent=0 // pred_region
    _
  $region21: #{tversky_focal_loss.1} parent=0 // pred_fallthru
    _

</llo_original>
